<compile_context>
chip_gen: v6e
topology: v6e:2x2x1
jax: 0.10.0
libtpu: 0.0.40
codegen_flags: <defaults>
</compile_context>

<pallas_src>
import functools

import jax
import jax.numpy as jnp
from jax.experimental import pallas as pl
from jax.experimental.pallas import tpu as pltpu


def _reward_gather_kernel(G, rows_ref, h_ref, w_ref, out_ref, hbuf, sem):
    """One grid step gathers G hidden rows via manual DMA and emits G rewards.

    rows_ref: [num_blocks*G] i32 SMEM (scalar prefetch): flat row index b*S + ends[b]
    h_ref:    [B*S, H] hidden_states left in HBM (memory_space=pl.ANY)
    w_ref:    [1, H] f32 v_head weight (same block every step -> VMEM resident)
    out_ref:  [1, 1, G] f32 rewards for this group (one lane-dense store)
    hbuf:     [G, H] VMEM gather scratch (backbone dtype)
    sem:      [G] DMA semaphores
    """
    base = pl.program_id(0) * G

    # Issue all G row gathers up front so the small HBM reads stay in flight
    # together — the kernel is DMA-latency bound, not bandwidth bound.
    @pl.loop(0, G)
    def _start(g):
        row = rows_ref[base + g]
        pltpu.make_async_copy(h_ref.at[row], hbuf.at[g], sem.at[g]).start()

    # Wait for all G gathers before computing.
    @pl.loop(0, G)
    def _wait(g):
        pltpu.make_async_copy(h_ref.at[0], hbuf.at[g], sem.at[g]).wait()

    # v_head over the whole [G, H] tile: one f32 cast (keep f32 math: v5e has no
    # bf16 VPU), VPU multiply, XLU lane reduce — no N=1 MXU dot.
    h = hbuf[...].astype(jnp.float32)              # [G, H]
    w = w_ref[...].astype(jnp.float32)             # [1, H]
    r = jnp.sum(h * w, axis=-1)                    # [G]
    out_ref[...] = r.reshape(1, 1, G)              # single lane-dense store


def reward_head(hidden_states, input_ids, v_head_w, pad_id, group_size=None):
    """Fused v_head + first-PAD gather.

    hidden_states: [B, S, H] float (kept in its backbone dtype; no HBM up-cast copy)
    input_ids:     [B, S] int
    v_head_w:      [1, H]  (nn.Linear(n_embd, 1, bias=False) weight)
    returns:       [B, 1] float32 rewards
    """
    B, S, H = hidden_states.shape

    if group_size is None:
        # Lane-dense groups of up to 128 rewards per step; keep >= 2 grid steps
        # where the batch allows so v7x's second TensorCore gets work.
        group_size = min(128, max(8, pl.cdiv(B, 2)))
    # Keep the [G, H] gather scratch well under the scoped-VMEM default
    # (v7x physical VMEM is only 64 MiB).
    bytes_per_row = H * hidden_states.dtype.itemsize
    group_size = max(8, min(int(group_size), (8 * 1024 * 1024) // max(bytes_per_row, 1)))
    G = int(group_size)

    num_blocks = pl.cdiv(B, G)
    B_pad = num_blocks * G

    # ends = first PAD index (0 if none). Tiny — computed in the XLA prologue
    # directly on int/bool (no f32 temp) and scalar-prefetched so the kernel
    # only ever touches the B gathered rows of hidden_states.
    ends = jnp.argmax(input_ids == pad_id, axis=1).astype(jnp.int32)        # [B]
    rows = ends + jnp.arange(B, dtype=jnp.int32) * S                        # b*S + ends[b]
    rows = jnp.pad(rows, (0, B_pad - B))                                    # pad -> row 0

    # Flat [B*S, H] view (trivial reshape, no dtype copy).
    h_flat = hidden_states.reshape(B * S, H)
    # TODO(synk): torch v_head is nn.Linear(..., dtype=float16); weight kept f32 here,
    # accumulation is f32 either way.
    w_row = v_head_w.reshape(1, H).astype(jnp.float32)
    # TODO(synk): for fp16/bf16 backbones, single-row sublane-granular DMA into the
    # packed [G, H] scratch may warrant the bitcast-pairs-to-u32 gather trick.

    grid_spec = pltpu.PrefetchScalarGridSpec(
        num_scalar_prefetch=1,
        grid=(num_blocks,),
        in_specs=[
            pl.BlockSpec(memory_space=pl.ANY),              # hidden_states stay in HBM
            pl.BlockSpec((1, H), lambda b, rows: (0, 0)),   # weight resident in VMEM
        ],
        out_specs=pl.BlockSpec((1, 1, G), lambda b, rows: (b, 0, 0)),
        scratch_shapes=[
            pltpu.VMEM((G, H), hidden_states.dtype),
            pltpu.SemaphoreType.DMA((G,)),
        ],
    )

    out = pl.pallas_call(
        functools.partial(_reward_gather_kernel, G),
        out_shape=jax.ShapeDtypeStruct((num_blocks, 1, G), jnp.float32),
        grid_spec=grid_spec,
        compiler_params=pltpu.CompilerParams(
            dimension_semantics=("parallel",)),   # v7x: split groups across both TCs
    )(rows, h_flat, w_row)

    return out.reshape(B_pad)[:B].reshape(B, 1)


def synthetic_transformer(input_ids, params):
    # TODO(synk): pretrained GPT-J/NeoX backbone (AutoModelForCausalLM) has no clean
    # Pallas equivalent here; stand-in is a deterministic embedding + tanh dense layer
    # producing fp32 hidden_states (torch's default from_pretrained dtype).
    emb = params["wte"][input_ids]                       # [B, S, H]
    return jnp.tanh(emb @ params["w_mix"])               # [B, S, H] f32


def reference_forward(hidden_states, input_ids, v_head_w, pad_id):
    """Pure-JAX replica of the torch forward, for correctness check."""
    B, S, H = hidden_states.shape
    h = hidden_states.astype(jnp.float32)
    w = v_head_w.reshape(H).astype(jnp.float32)
    rewards = jnp.sum(h * w[None, None, :], axis=-1)     # [B, S] = v_head(h).squeeze(-1)
    ends = jnp.argmax((input_ids == pad_id).astype(jnp.float32), axis=1)
    return rewards[jnp.arange(B), ends][:, None]         # [B, 1]


if __name__ == "__main__":
    B, S, H, VOCAB = 2, 8, 128, 50
    PAD_ID = 3

    key = jax.random.PRNGKey(0)
    k_ids, k_wte, k_mix, k_vh = jax.random.split(key, 4)

    # Row 0 has PAD padding from position 5 on; row 1 has no PAD at all
    # (exercises the argmax -> 0 fallback).
    input_ids = jax.random.randint(k_ids, (B, S), 4, VOCAB, dtype=jnp.int32)
    input_ids = input_ids.at[0, 5].set(PAD_ID).at[0, 6].set(PAD_ID).at[0, 7].set(PAD_ID)

    params = {
        "wte": 0.02 * jax.random.normal(k_wte, (VOCAB, H), dtype=jnp.float32),
        "w_mix": 0.02 * jax.random.normal(k_mix, (H, H), dtype=jnp.float32),
    }
    # nn.Linear(n_embd, 1, bias=False) weight shape: [1, H]
    v_head_w = 0.02 * jax.random.normal(k_vh, (1, H), dtype=jnp.float32)

    hidden_states = synthetic_transformer(input_ids, params)      # [B, S, H]

    rewards = reward_head(hidden_states, input_ids, v_head_w, PAD_ID)
    rewards = jax.block_until_ready(rewards)

    ref = reference_forward(hidden_states, input_ids, v_head_w, PAD_ID)
    assert rewards.shape == (B, 1), rewards.shape
    assert float(jnp.max(jnp.abs(rewards - ref))) < 1e-4, (rewards, ref)

    print("KERNEL_OK")
</pallas_src>

<mosaic_0001>
module attributes {stable_mosaic.version = 11 : i64} {
  func.func @_reward_gather_kernel(%arg0: i32, %arg1: memref<8xi32, #tpu.memory_space<smem>>, %arg2: memref<16x128xf32, #tpu.memory_space<any>>, %arg3: memref<1x128xf32, #tpu.memory_space<vmem>>, %arg4: memref<1x1x8xf32, #tpu.memory_space<vmem>>, %arg5: memref<8x128xf32, #tpu.memory_space<vmem>>, %arg6: memref<8x!tpu.dma_semaphore, #tpu.memory_space<semaphore_mem>>) attributes {dimension_semantics = [#tpu.dimension_semantics<parallel>], iteration_bounds = array<i64: 1>, scalar_prefetch = 1 : i64, scratch_operands = 2 : i64, tpu.core_type = #tpu.core_type<tc>, window_params = [{}, {pipeline_mode = #tpu.pipeline_mode<synchronous>, transform_indices = @transform_1, window_bounds = array<i64: 1, 128>}, {transform_indices = @transform_2, window_bounds = array<i64: 1, 1, 8>}]} {
    %c8_i32 = arith.constant 8 : i32
    %0 = arith.muli %arg0, %c8_i32 : i32
    %c0_i32 = arith.constant 0 : i32
    %c8_i32_0 = arith.constant 8 : i32
    %1 = arith.addi %c0_i32, %c8_i32_0 : i32
    %c1_i32 = arith.constant 1 : i32
    scf.for %arg7 = %c0_i32 to %1 step %c1_i32  : i32 {
      %c1_i32_12 = arith.constant 1 : i32
      %10 = arith.muli %arg7, %c1_i32_12 : i32
      %c0_i32_13 = arith.constant 0 : i32
      %11 = arith.addi %c0_i32_13, %10 : i32
      %12 = arith.addi %0, %11 : i32
      %13 = arith.index_cast %12 : i32 to index
      %14 = memref.load %arg1[%13] : memref<8xi32, #tpu.memory_space<smem>>
      %c0_i32_14 = arith.constant 0 : i32
      %15 = tpu.memref_slice %arg2[%14, %c0_i32_14] : memref<16x128xf32, #tpu.memory_space<any>> -> memref<1x128xf32, #tpu.memory_space<any>>
      %16 = tpu.memref_squeeze %15 : memref<1x128xf32, #tpu.memory_space<any>> -> memref<128xf32, #tpu.memory_space<any>>
      %c0_i32_15 = arith.constant 0 : i32
      %17 = tpu.memref_slice %arg5[%11, %c0_i32_15] : memref<8x128xf32, #tpu.memory_space<vmem>> -> memref<1x128xf32, #tpu.memory_space<vmem>>
      %18 = tpu.memref_squeeze %17 : memref<1x128xf32, #tpu.memory_space<vmem>> -> memref<128xf32, #tpu.memory_space<vmem>>
      %19 = tpu.memref_slice %arg6[%11] : memref<8x!tpu.dma_semaphore, #tpu.memory_space<semaphore_mem>> -> memref<1x!tpu.dma_semaphore, #tpu.memory_space<semaphore_mem>>
      %20 = tpu.memref_squeeze %19 : memref<1x!tpu.dma_semaphore, #tpu.memory_space<semaphore_mem>> -> memref<!tpu.dma_semaphore, #tpu.memory_space<semaphore_mem>>
      tpu.enqueue_dma source(%16 : memref<128xf32, #tpu.memory_space<any>>) target(%18 : memref<128xf32, #tpu.memory_space<vmem>>) target_semaphore(%20 : memref<!tpu.dma_semaphore, #tpu.memory_space<semaphore_mem>>)
    }
    %c8_i32_1 = arith.constant 8 : i32
    %c0_i32_2 = arith.constant 0 : i32
    %c8_i32_3 = arith.constant 8 : i32
    %2 = arith.addi %c0_i32_2, %c8_i32_3 : i32
    %c1_i32_4 = arith.constant 1 : i32
    scf.for %arg7 = %c0_i32_2 to %2 step %c1_i32_4  : i32 {
      %c1_i32_12 = arith.constant 1 : i32
      %10 = arith.muli %arg7, %c1_i32_12 : i32
      %c0_i32_13 = arith.constant 0 : i32
      %11 = arith.addi %c0_i32_13, %10 : i32
      %c0_i32_14 = arith.constant 0 : i32
      %c0_i32_15 = arith.constant 0 : i32
      %12 = tpu.memref_slice %arg2[%c0_i32_14, %c0_i32_15] : memref<16x128xf32, #tpu.memory_space<any>> -> memref<1x128xf32, #tpu.memory_space<any>>
      %13 = tpu.memref_squeeze %12 : memref<1x128xf32, #tpu.memory_space<any>> -> memref<128xf32, #tpu.memory_space<any>>
      %c0_i32_16 = arith.constant 0 : i32
      %14 = tpu.memref_slice %arg5[%11, %c0_i32_16] : memref<8x128xf32, #tpu.memory_space<vmem>> -> memref<1x128xf32, #tpu.memory_space<vmem>>
      %15 = tpu.memref_squeeze %14 : memref<1x128xf32, #tpu.memory_space<vmem>> -> memref<128xf32, #tpu.memory_space<vmem>>
      %16 = tpu.memref_slice %arg6[%11] : memref<8x!tpu.dma_semaphore, #tpu.memory_space<semaphore_mem>> -> memref<1x!tpu.dma_semaphore, #tpu.memory_space<semaphore_mem>>
      %17 = tpu.memref_squeeze %16 : memref<1x!tpu.dma_semaphore, #tpu.memory_space<semaphore_mem>> -> memref<!tpu.dma_semaphore, #tpu.memory_space<semaphore_mem>>
      tpu.wait_dma2 semaphore(%17 : memref<!tpu.dma_semaphore, #tpu.memory_space<semaphore_mem>>) src(%13 : memref<128xf32, #tpu.memory_space<any>>) dst(%15 : memref<128xf32, #tpu.memory_space<vmem>>)
    }
    %c8_i32_5 = arith.constant 8 : i32
    %c0 = arith.constant 0 : index
    %c0_6 = arith.constant 0 : index
    %3 = vector.load %arg5[%c0, %c0_6] : memref<8x128xf32, #tpu.memory_space<vmem>>, vector<8x128xf32>
    %c0_7 = arith.constant 0 : index
    %c0_8 = arith.constant 0 : index
    %4 = vector.load %arg3[%c0_7, %c0_8] : memref<1x128xf32, #tpu.memory_space<vmem>>, vector<1x128xf32>
    %5 = vector.broadcast %4 : vector<1x128xf32> to vector<8x128xf32>
    %6 = arith.mulf %3, %5 : vector<8x128xf32>
    %cst = arith.constant dense<0.000000e+00> : vector<8xf32>
    %7 = vector.multi_reduction <add>, %6, %cst [1] : vector<8x128xf32> to vector<8xf32>
    %8 = vector.shape_cast %7 : vector<8xf32> to vector<1x1x8xf32>
    %c0_9 = arith.constant 0 : index
    %c0_10 = arith.constant 0 : index
    %c0_11 = arith.constant 0 : index
    %9 = vector.load %arg4[%c0_9, %c0_10, %c0_11] : memref<1x1x8xf32, #tpu.memory_space<vmem>>, vector<1x1x8xf32>
    tpu.vector_store %arg4[%c0_9, %c0_10, %c0_11], %8 {strides = array<i32>} : memref<1x1x8xf32, #tpu.memory_space<vmem>>, vector<1x1x8xf32>,
    return
  }
  func.func @transform_1(%arg0: i32, %arg1: memref<8xi32, #tpu.memory_space<smem>>) -> (i32, i32) {
    %c0_i32 = arith.constant 0 : i32
    %c0_i32_0 = arith.constant 0 : i32
    %c0_i32_1 = arith.constant 0 : i32
    return %c0_i32, %c0_i32_0 : i32, i32
  }
  func.func @transform_2(%arg0: i32, %arg1: memref<8xi32, #tpu.memory_space<smem>>) -> (i32, i32, i32) {
    %c0_i32 = arith.constant 0 : i32
    %c0_i32_0 = arith.constant 0 : i32
    %c0_i32_1 = arith.constant 0 : i32
    return %arg0, %c0_i32, %c0_i32_0 : i32, i32, i32
  }
}

</mosaic_0001>

<llo_original>
// kernel: tpu_custom_call.1
$region0: #{tpu_custom_call.1}
  #allocation0 [shape = 'u32[]', space=smem, size = 0x4, offset = 0x4, fixed_abs, tag = 'smem constant byte address 0x4 - core index']
  #allocation1 [shape = 'u32[144,128]{1,0:T(1,128)}', space=vmem, size = 0x12000, scoped, tag = 'internal scratch']
  #allocation2 [shape = 'f32[8,128]{1,0:T(8,128)}', space=vmem, size = 0x1000, scoped, tag = 'scratch operand']
  #allocation3 [shape = 's32[8]{0}', space=sflag, size = 0x20, scoped, tag = 'scratch operand']
  #allocation4 [shape = 's32[1]{0}', space=sflag, size = 0x4, scoped, tag = 'scoped memory for tpu_custom_call.1']
  #allocation5 [shape = 'u8[512]{0}', space=smem, size = 0x200, scoped, tag = 'prefetched SMEM operand 0']
  #allocation8 [shape = 's32[]', space=sflag, size = 0x4, offset = 0, fixed_abs, tag = 'sflag constant byte address 0x0 - dummy sync flag']
  #allocation9 [shape = 's32[]', space=sflag, size = 0x4, offset = 0, fixed_abs, tag = 'sflag constant byte address 0x0 - dummy sync flag']
  #allocation10 [shape = 'u32[]', space=smem, size = 0x4, offset = 0x44, fixed_abs, tag = 'smem constant byte address 0x44 - assertion arg 0']
  #allocation11 [shape = 'u32[]', space=smem, size = 0x4, offset = 0x48, fixed_abs, tag = 'smem constant byte address 0x48 - assertion arg 1']
  %s0 = inlined_call_operand.hbm [shape: s32[8], index: 0, kind: input, shape index: {}]
  %s1 = inlined_call_operand.hbm [shape: f32[16,128], index: 1, kind: input, shape index: {}]
  %s2 = inlined_call_operand.vmem [shape: f32[1,128], index: 2, kind: input, shape index: {}]
  %s3 = inlined_call_operand.hbm [shape: f32[1,1,8], index: 3, kind: output, shape index: {}]
  %s4 = sld [smem:[#allocation0]]
  $region32: #{tpu_custom_call.1} parent=0
    _
  %s6 = ssub.s32 1, %s4
  %s7 = scalar_select 0, %s6, %s4
  %9 = dma.hbm_to_smem %s0, 16, [#allocation5], [#allocation4]
  %10 = dma.done [#allocation4], 16
  %11 = sfence
  $region1: #{tpu_custom_call.1} parent=0
    #allocation6 [shape = 'u8[512]{0}', space=vmem, size = 0x400, scoped, tag = 'output window, operand 0, single buffered']
    #allocation7 [shape = 's32[1]{0}', space=sflag, size = 0x4, scoped, tag = 'scoped memory for tpu_custom_call.1']
    %12 = vsyncpa [#allocation7], 0
    // Predicated region
    $region2: #{tpu_custom_call.1} parent=1 // pred_check
      _
    $region3: #{tpu_custom_call.1} parent=1 // pred_check_branch
      %14 = sbr.rel (0) target = $region5
    $region4: #{tpu_custom_call.1} parent=1 // pred_region
      _
    $region5: #{tpu_custom_call.1} parent=1 // pred_fallthru
      _
    %s15 = smul.u32 0, 8
    loop: start=0, step=1, limit=8
    $region6: #{tpu_custom_call.1} parent=1 // loop_pre_header
      _
    $region7: #{tpu_custom_call.1} parent=1 // loop_header
      %s17 = sphi 0, %s21
      %p18 = scmp.ge.s32.totalorder %s17, 8
    $region8: #{tpu_custom_call.1} parent=1 // loop_header_branch
      %20 = sbr.rel (%p18) target = $region12
    $region9: #{tpu_custom_call.1} parent=1 // loop_body
      %s22 = sadd.s32 %s15, %s17
      %s23 = sld [smem:[#allocation5 + %s22]]
      %s24 = smul.addr %s23, 16
      %s25 = scalar_lea.hbm %s1, %s24
      %s26 = scalar_lea.vmem [#allocation2], %s17
      %s27 = scalar_lea.sflag [#allocation3], %s17
      // Predicated region
      $region13: #{tpu_custom_call.1} parent=9 // pred_check
        _
      $region14: #{tpu_custom_call.1} parent=9 // pred_check_branch
        %29 = sbr.rel target = $region16
      $region15: #{tpu_custom_call.1} parent=9 // pred_region
        %30 = sst [smem:[#allocation10]] [#allocation9]
        %31 = sst [smem:[#allocation11]] [#allocation8]
      $region16: #{tpu_custom_call.1} parent=9 // pred_fallthru
        _
      %33 = shalt.err (0)
      %s35 = sshll.u32 %s26, 4
      %s36 = int_to_ptr.vmem [resolvable:$true] %s35
      %38 = dma.hbm_to_vmem [thread:$0]  %s25, 16, %s36, %s27
    $region10: #{tpu_custom_call.1} parent=1 // loop_footer
      %s21 = sadd.s32 1, %s17
    $region11: #{tpu_custom_call.1} parent=1 // loop_footer_branch
      %16 = sbr.rel target = $region7
    $region12: #{tpu_custom_call.1} parent=1 // loop_exit
      _
    loop: start=0, step=1, limit=8
    $region17: #{tpu_custom_call.1} parent=1 // loop_pre_header
      _
    $region18: #{tpu_custom_call.1} parent=1 // loop_header
      %s40 = sphi 0, %s44
      %p41 = scmp.ge.s32.totalorder %s40, 8
    $region19: #{tpu_custom_call.1} parent=1 // loop_header_branch
      %43 = sbr.rel (%p41) target = $region23
    $region20: #{tpu_custom_call.1} parent=1 // loop_body
      %s45 = scalar_lea.sflag [#allocation3], %s40
      %47 = dma.done %s45, 16
    $region21: #{tpu_custom_call.1} parent=1 // loop_footer
      %s44 = sadd.s32 1, %s40
    $region22: #{tpu_custom_call.1} parent=1 // loop_footer_branch
      %39 = sbr.rel target = $region18
    $region23: #{tpu_custom_call.1} parent=1 // loop_exit
      _
    %v48 = vld [vmem:[#allocation2] sm:$0xff]
    %v49 = vld [vmem:[%s2] sm:$0x1]
    %v51 = vlaneseq
    %v52 = vshrl.u32 %v51, 7
    %v53 = vsub.s32 0, %v52
    %v54 = vrot.slane %v49, %v53
    %v56 = vmul.f32 %v48, %v54
    %57 = vadd.xlane.f32.xlu0 %v56
    %v58 = vpop.xlane.xlu0 %57
    %v60 = vlaneseq
    %v61 = vand.u32 %v60, 127
    %v62 = vlaneseq
    %v63 = vshrl.u32 %v62, 7
    %v64 = vsub.s32 %v61, %v63
    %v65 = vrot.slane %v58, %v64
    %vm67 = vcmask 57344
    %68 = vst.msk [vmem:[#allocation6] sm:$0x1] %vm67, %v65
    // Predicated region
    $region24: #{tpu_custom_call.1} parent=1 // pred_check
      _
    $region25: #{tpu_custom_call.1} parent=1 // pred_check_branch
      %70 = sbr.rel (0) target = $region27
    $region26: #{tpu_custom_call.1} parent=1 // pred_region
      %s72 = ssub.s32 16, 16
      %73 = vsyncadd [#allocation7], %s72
      %s75 = sshll.u32 [#allocation6], 4
      %s76 = int_to_ptr.vmem [resolvable:$true] %s75
      %78 = dma.vmem_to_hbm [thread:$0]  %s76, 16, %s3, [#allocation7]
    $region27: #{tpu_custom_call.1} parent=1 // pred_fallthru
      _
    // Predicated region
    $region28: #{tpu_custom_call.1} parent=1 // pred_check
      _
    $region29: #{tpu_custom_call.1} parent=1 // pred_check_branch
      %80 = sbr.rel (0) target = $region31
    $region30: #{tpu_custom_call.1} parent=1 // pred_region
      %81 = dma.done [#allocation7], 16
    $region31: #{tpu_custom_call.1} parent=1 // pred_fallthru
      _
    %82 = vsyncpa [#allocation7], 1
  %83 = vsyncmov [#allocation3]
  %s84 = vpop.sfrf %83
  %p85 = scmp.eq.s32.totalorder %s84, 0
  %p86 = pneg %p85
  %88 = shalt.err (%p86)
  %s89 = scalar_lea.sflag [#allocation3], 1
  %90 = vsyncmov %s89
  %s91 = vpop.sfrf %90
  %p92 = scmp.eq.s32.totalorder %s91, 0
  %p93 = pneg %p92
  %95 = shalt.err (%p93)
  %s96 = scalar_lea.sflag [#allocation3], 2
  %97 = vsyncmov %s96
  %s98 = vpop.sfrf %97
  %p99 = scmp.eq.s32.totalorder %s98, 0
  %p100 = pneg %p99
  %102 = shalt.err (%p100)
  %s103 = scalar_lea.sflag [#allocation3], 3
  %104 = vsyncmov %s103
  %s105 = vpop.sfrf %104
  %p106 = scmp.eq.s32.totalorder %s105, 0
  %p107 = pneg %p106
  %109 = shalt.err (%p107)
  %s110 = scalar_lea.sflag [#allocation3], 4
  %111 = vsyncmov %s110
  %s112 = vpop.sfrf %111
  %p113 = scmp.eq.s32.totalorder %s112, 0
  %p114 = pneg %p113
  %116 = shalt.err (%p114)
  %s117 = scalar_lea.sflag [#allocation3], 5
  %118 = vsyncmov %s117
  %s119 = vpop.sfrf %118
  %p120 = scmp.eq.s32.totalorder %s119, 0
  %p121 = pneg %p120
  %123 = shalt.err (%p121)
  %s124 = scalar_lea.sflag [#allocation3], 6
  %125 = vsyncmov %s124
  %s126 = vpop.sfrf %125
  %p127 = scmp.eq.s32.totalorder %s126, 0
  %p128 = pneg %p127
  %130 = shalt.err (%p128)
  %s131 = scalar_lea.sflag [#allocation3], 7
  %132 = vsyncmov %s131
  %s133 = vpop.sfrf %132
  %p134 = scmp.eq.s32.totalorder %s133, 0
  %p135 = pneg %p134
  %137 = shalt.err (%p135)

</llo_original>
